<compile_context>
chip_gen: v7x
topology: tpu7x:2x2x1
jax: 0.10.0
libtpu: 0.0.40
codegen_flags: <defaults>
</compile_context>

<pallas_src>
import jax
import jax.numpy as jnp
from jax.experimental import pallas as pl
from jax.experimental.pallas import tpu as pltpu


def _round_up(n: int, m: int) -> int:
    return ((n + m - 1) // m) * m


def _attention_kernel(b2_ref, x_ref, w1_ref, b1_ref, w2_ref, o_ref):
    # b2_ref : SMEM (1,)      second-Linear bias (scalar)
    # x_ref  : VMEM (tb, D)   input tile (true feature width, no padding)
    # w1_ref : VMEM (D, Hp)   first-Linear weight (resident across grid)
    # b1_ref : VMEM (1, Hp)   first-Linear bias
    # w2_ref : VMEM (1, Hp)   second-Linear weight as a row vector
    # o_ref  : VMEM (tb, D)   output tile
    x = x_ref[...]
    # Linear(in_features -> 256) + ReLU   (MXU matmul, f32 accumulate)
    h = jnp.dot(x, w1_ref[...], preferred_element_type=jnp.float32) + b1_ref[...]
    h = jnp.maximum(h, 0.0)
    # Linear(256 -> 1): broadcast multiply + lane reduction, then add bias
    s = jnp.sum(h * w2_ref[...], axis=-1, keepdims=True) + b2_ref[0]  # (tb, 1)
    # Sigmoid attention weight; reciprocal on the EUP (free slot vs VPU)
    w = pl.reciprocal(1.0 + jnp.exp(-s), approx=True)
    # Scale the input by its attention weight in the input dtype (no f32 tile copy)
    o_ref[...] = (x * w.astype(x.dtype)).astype(o_ref.dtype)


def attention_module(x, w1, b1, w2, b2, *, vmem_budget_bytes: int = 40 * 1024 * 1024):
    """out = x * sigmoid(relu(x @ w1 + b1) @ w2 + b2), x: (B, in_features)."""
    B, D = x.shape
    H = w1.shape[1]
    out_dtype = x.dtype
    itemsize = jnp.dtype(x.dtype).itemsize
    sub = 8 if itemsize >= 4 else 16  # sublane multiple (f32 vs bf16 packing)

    # --- pad only the tiny weights: hidden dim -> multiple of 128 (one-time) ---
    Hp = max(128, _round_up(H, 128))
    if Hp != H:
        w1 = jnp.pad(w1, ((0, 0), (0, Hp - H)))
        b1 = jnp.pad(b1, ((0, Hp - H),))
        w2 = jnp.pad(w2, ((0, Hp - H), (0, 0)))

    w1 = w1.astype(x.dtype)
    b1_row = b1.reshape(1, Hp).astype(jnp.float32)
    w2_row = w2.reshape(1, Hp).astype(jnp.float32)
    b2_s = jnp.asarray(b2, dtype=jnp.float32).reshape(1)
    w1_itemsize = jnp.dtype(w1.dtype).itemsize

    # --- batch tile sized against an explicit VMEM budget --------------------
    # Conservative: count W1/b1/w2 as double-buffered even though their block
    # index is constant across the grid.
    fixed_bytes = 2 * (D * Hp * w1_itemsize + 2 * Hp * 4)
    per_row = 4 * D * itemsize + Hp * 4  # 2x in bufs + 2x out bufs + f32 hidden
    avail = max(vmem_budget_bytes - fixed_bytes, per_row * sub)
    tb = max(sub, min(8192, (avail // per_row) // sub * sub))
    tb = min(tb, _round_up(B, sub))  # small problems -> single grid step
    # TODO(synk): K-tile over in_features (2nd grid axis + f32 accumulator +
    # pl.when init/finalize) if D grows so large (>~40K f32) that the resident
    # W1 block alone squeezes v7x's 64 MiB/TC VMEM.

    grid = (pl.cdiv(B, tb),)  # ragged boundary block handled by Pallas masking

    out = pl.pallas_call(
        _attention_kernel,
        out_shape=jax.ShapeDtypeStruct((B, D), out_dtype),
        grid_spec=pltpu.PrefetchScalarGridSpec(
            num_scalar_prefetch=0,
            grid=grid,
            in_specs=[
                pl.BlockSpec(memory_space=pltpu.MemorySpace.SMEM),  # b2 scalar
                pl.BlockSpec((tb, D), lambda i: (i, 0)),            # x tile
                pl.BlockSpec((D, Hp), lambda i: (0, 0)),            # W1 (resident)
                pl.BlockSpec((1, Hp), lambda i: (0, 0)),            # b1
                pl.BlockSpec((1, Hp), lambda i: (0, 0)),            # w2 row
            ],
            out_specs=pl.BlockSpec((tb, D), lambda i: (i, 0)),
        ),
        compiler_params=pltpu.CompilerParams(
            dimension_semantics=("parallel",),      # megacore-shardable on v7x
            vmem_limit_bytes=48 * 1024 * 1024,      # > buffer budget, < v7x 64 MiB/TC
        ),
    )(b2_s, x, w1, b1_row, w2_row)

    return out


if __name__ == "__main__":
    key = jax.random.PRNGKey(0)
    k_x, k_w1, k_b1, k_w2, k_b2 = jax.random.split(key, 5)

    # Small demo shapes; in_features=64 exercises the non-128 feature width path.
    B, D, H = 16, 64, 256
    x = jax.random.normal(k_x, (B, D), dtype=jnp.float32)
    w1 = jax.random.normal(k_w1, (D, H), dtype=jnp.float32) * (1.0 / jnp.sqrt(D))
    b1 = jax.random.normal(k_b1, (H,), dtype=jnp.float32) * 0.1
    w2 = jax.random.normal(k_w2, (H, 1), dtype=jnp.float32) * (1.0 / jnp.sqrt(H))
    b2 = jax.random.normal(k_b2, (1,), dtype=jnp.float32) * 0.1

    out = attention_module(x, w1, b1, w2, b2)
    out = jax.block_until_ready(out)

    # Plain-JAX reference of AttentionModule.forward
    h_ref = jax.nn.relu(x @ w1 + b1)
    w_ref = jax.nn.sigmoid(h_ref @ w2 + b2)
    ref = x * w_ref

    assert out.shape == ref.shape
    assert jnp.allclose(out, ref, rtol=2e-3, atol=2e-3), "mismatch vs reference"
    print("KERNEL_OK")
</pallas_src>

<mosaic_0001>
module attributes {stable_mosaic.version = 11 : i64} {
  func.func @_attention_kernel(%arg0: i32, %arg1: memref<1xf32, #tpu.memory_space<smem>>, %arg2: memref<16x64xf32, #tpu.memory_space<vmem>>, %arg3: memref<64x256xf32, #tpu.memory_space<vmem>>, %arg4: memref<1x256xf32, #tpu.memory_space<vmem>>, %arg5: memref<1x256xf32, #tpu.memory_space<vmem>>, %arg6: memref<16x64xf32, #tpu.memory_space<vmem>>) attributes {dimension_semantics = [#tpu.dimension_semantics<parallel>], iteration_bounds = array<i64: 1>, scalar_prefetch = 0 : i64, scratch_operands = 0 : i64, tpu.core_type = #tpu.core_type<tc>, window_params = [{transform_indices = @transform_0, window_bounds = array<i64: 1>}, {transform_indices = @transform_1, window_bounds = array<i64: 16, 64>}, {pipeline_mode = #tpu.pipeline_mode<synchronous>, transform_indices = @transform_2, window_bounds = array<i64: 64, 256>}, {pipeline_mode = #tpu.pipeline_mode<synchronous>, transform_indices = @transform_3, window_bounds = array<i64: 1, 256>}, {pipeline_mode = #tpu.pipeline_mode<synchronous>, transform_indices = @transform_4, window_bounds = array<i64: 1, 256>}, {transform_indices = @transform_5, window_bounds = array<i64: 16, 64>}]} {
    %c0 = arith.constant 0 : index
    %c0_0 = arith.constant 0 : index
    %0 = vector.load %arg2[%c0, %c0_0] : memref<16x64xf32, #tpu.memory_space<vmem>>, vector<16x64xf32>
    %c0_1 = arith.constant 0 : index
    %c0_2 = arith.constant 0 : index
    %1 = vector.load %arg3[%c0_1, %c0_2] : memref<64x256xf32, #tpu.memory_space<vmem>>, vector<64x256xf32>
    %cst = arith.constant dense<0.000000e+00> : vector<16x256xf32>
    %2 = tpu.matmul %0, %1, %cst {dimension_numbers = #tpu.dot_dimension_numbers<[1], [0], [0], [1], [0, 0, 1, 1], [], []>} : vector<16x64xf32>, vector<64x256xf32>, vector<16x256xf32> -> vector<16x256xf32>
    %c0_3 = arith.constant 0 : index
    %c0_4 = arith.constant 0 : index
    %3 = vector.load %arg4[%c0_3, %c0_4] : memref<1x256xf32, #tpu.memory_space<vmem>>, vector<1x256xf32>
    %4 = vector.broadcast %3 : vector<1x256xf32> to vector<16x256xf32>
    %5 = arith.addf %2, %4 : vector<16x256xf32>
    %cst_5 = arith.constant 0.000000e+00 : f32
    %6 = vector.broadcast %cst_5 : f32 to vector<16x256xf32>
    %7 = arith.maximumf %5, %6 : vector<16x256xf32>
    %c0_6 = arith.constant 0 : index
    %c0_7 = arith.constant 0 : index
    %8 = vector.load %arg5[%c0_6, %c0_7] : memref<1x256xf32, #tpu.memory_space<vmem>>, vector<1x256xf32>
    %9 = vector.broadcast %8 : vector<1x256xf32> to vector<16x256xf32>
    %10 = arith.mulf %7, %9 : vector<16x256xf32>
    %cst_8 = arith.constant dense<0.000000e+00> : vector<16xf32>
    %11 = vector.multi_reduction <add>, %10, %cst_8 [1] : vector<16x256xf32> to vector<16xf32>
    %12 = vector.shape_cast %11 : vector<16xf32> to vector<16x1xf32>
    %c0_9 = arith.constant 0 : index
    %13 = memref.load %arg1[%c0_9] : memref<1xf32, #tpu.memory_space<smem>>
    %14 = vector.broadcast %13 : f32 to vector<16x1xf32>
    %15 = arith.addf %12, %14 : vector<16x1xf32>
    %cst_10 = arith.constant 0.000000e+00 : f32
    %16 = vector.broadcast %cst_10 : f32 to vector<16x1xf32>
    %17 = arith.subf %16, %15 : vector<16x1xf32>
    %18 = math.exp %17 : vector<16x1xf32>
    %cst_11 = arith.constant 1.000000e+00 : f32
    %19 = vector.broadcast %cst_11 : f32 to vector<16x1xf32>
    %20 = arith.addf %19, %18 : vector<16x1xf32>
    %21 = tpu.reciprocal %20 {approx = true} : vector<16x1xf32> -> vector<16x1xf32>
    %22 = vector.broadcast %21 : vector<16x1xf32> to vector<16x64xf32>
    %23 = arith.mulf %0, %22 : vector<16x64xf32>
    %c0_12 = arith.constant 0 : index
    %c0_13 = arith.constant 0 : index
    %24 = vector.load %arg6[%c0_12, %c0_13] : memref<16x64xf32, #tpu.memory_space<vmem>>, vector<16x64xf32>
    tpu.vector_store %arg6[%c0_12, %c0_13], %23 {strides = array<i32>} : memref<16x64xf32, #tpu.memory_space<vmem>>, vector<16x64xf32>,
    return
  }
  func.func @transform_0(%arg0: i32) -> i32 {
    %c0_i32 = arith.constant 0 : i32
    %c0_i32_0 = arith.constant 0 : i32
    return %c0_i32 : i32
  }
  func.func @transform_1(%arg0: i32) -> (i32, i32) {
    %c0_i32 = arith.constant 0 : i32
    %c0_i32_0 = arith.constant 0 : i32
    return %arg0, %c0_i32 : i32, i32
  }
  func.func @transform_2(%arg0: i32) -> (i32, i32) {
    %c0_i32 = arith.constant 0 : i32
    %c0_i32_0 = arith.constant 0 : i32
    %c0_i32_1 = arith.constant 0 : i32
    return %c0_i32, %c0_i32_0 : i32, i32
  }
  func.func @transform_3(%arg0: i32) -> (i32, i32) {
    %c0_i32 = arith.constant 0 : i32
    %c0_i32_0 = arith.constant 0 : i32
    %c0_i32_1 = arith.constant 0 : i32
    return %c0_i32, %c0_i32_0 : i32, i32
  }
  func.func @transform_4(%arg0: i32) -> (i32, i32) {
    %c0_i32 = arith.constant 0 : i32
    %c0_i32_0 = arith.constant 0 : i32
    %c0_i32_1 = arith.constant 0 : i32
    return %c0_i32, %c0_i32_0 : i32, i32
  }
  func.func @transform_5(%arg0: i32) -> (i32, i32) {
    %c0_i32 = arith.constant 0 : i32
    %c0_i32_0 = arith.constant 0 : i32
    return %arg0, %c0_i32 : i32, i32
  }
}

</mosaic_0001>

<llo_original>
// kernel: tpu_custom_call.1
$region0: #{tpu_custom_call.1}
  #allocation0 [shape = 'u32[]', space=smem, size = 0x4, offset = 0x4, fixed_abs, tag = 'smem constant byte address 0x4 - core index']
  #allocation1 [shape = 'u32[144,128]{1,0:T(1,128)}', space=vmem, size = 0x12000, scoped, tag = 'internal scratch']
  #allocation2 [shape = 'f32[1]{0:T(128)S(6)}', space=smem, size = 0x200, scoped, tag = 'scoped memory for tpu_custom_call.1']
  %s0 = inlined_call_operand.<no memory space> [shape: f32[1], index: 0, kind: input, shape index: {}]
  %s1 = inlined_call_operand.hbm [shape: f32[16,64], index: 1, kind: input, shape index: {}]
  %s2 = inlined_call_operand.hbm [shape: f32[64,256], index: 2, kind: input, shape index: {}]
  %s3 = inlined_call_operand.vmem [shape: f32[1,256], index: 3, kind: input, shape index: {}]
  %s4 = inlined_call_operand.vmem [shape: f32[1,256], index: 4, kind: input, shape index: {}]
  %s5 = inlined_call_operand.hbm [shape: f32[16,64], index: 5, kind: output, shape index: {}]
  %s6 = sld [smem:[#allocation0]]
  $region38: #{tpu_custom_call.1} parent=0
    _
  %s8 = ssub.s32 1, %s6
  %s9 = scalar_select 0, %s8, %s6
  %10 = sst [smem:[#allocation2]] %s0
  $region1: #{tpu_custom_call.1} parent=0
    #allocation3 [shape = 'u8[8192]{0}', space=vmem, size = 0x2000, scoped, tag = 'input window, operand 1, single buffered']
    #allocation4 [shape = 's32[1]{0}', space=sflag, size = 0x4, scoped, tag = 'scoped memory for tpu_custom_call.1']
    #allocation5 [shape = 's32[1]{0}', space=sflag, size = 0x4, scoped, tag = 'scoped memory for tpu_custom_call.1']
    #allocation6 [shape = 'u8[65536]{0}', space=vmem, size = 0x10000, scoped, tag = 'input window, operand 2, single buffered']
    #allocation7 [shape = 's32[1]{0}', space=sflag, size = 0x4, scoped, tag = 'scoped memory for tpu_custom_call.1']
    #allocation8 [shape = 'u8[8192]{0}', space=vmem, size = 0x2000, scoped, tag = 'output window, operand 0, single buffered']
    %11 = vsyncpa [#allocation4], 0
    %12 = vsyncpa [#allocation7], 0
    %13 = vsyncpa [#allocation5], 0
    // Predicated region
    $region2: #{tpu_custom_call.1} parent=1 // pred_check
      _
    $region3: #{tpu_custom_call.1} parent=1 // pred_check_branch
      %15 = sbr.rel (0) target = $region5
    $region4: #{tpu_custom_call.1} parent=1 // pred_region
      _
    $region5: #{tpu_custom_call.1} parent=1 // pred_fallthru
      _
    // Predicated region
    $region6: #{tpu_custom_call.1} parent=1 // pred_check
      _
    $region7: #{tpu_custom_call.1} parent=1 // pred_check_branch
      %17 = sbr.rel (0) target = $region9
    $region8: #{tpu_custom_call.1} parent=1 // pred_region
      %s19 = ssub.s32 256, 256
      %20 = vsyncadd [#allocation4], %s19
      %s21 = sshll.u32 [#allocation3], 4
      %s22 = int_to_ptr.vmem [resolvable:$true] %s21
      %27 = dma.hbm_to_vmem [thread:$0]  %s1, 256, %s22, [#allocation4], 128, 128, 8
    $region9: #{tpu_custom_call.1} parent=1 // pred_fallthru
      _
    // Predicated region
    $region10: #{tpu_custom_call.1} parent=1 // pred_check
      _
    $region11: #{tpu_custom_call.1} parent=1 // pred_check_branch
      %29 = sbr.rel (0) target = $region13
    $region12: #{tpu_custom_call.1} parent=1 // pred_region
      %s31 = ssub.s32 2048, 2048
      %32 = vsyncadd [#allocation7], %s31
      %s33 = sshll.u32 [#allocation6], 4
      %s34 = int_to_ptr.vmem [resolvable:$true] %s33
      %39 = dma.hbm_to_vmem [thread:$0]  %s2, 2048, %s34, [#allocation7], 256, 256, 16
    $region13: #{tpu_custom_call.1} parent=1 // pred_fallthru
      _
    // Predicated region
    $region14: #{tpu_custom_call.1} parent=1 // pred_check
      _
    $region15: #{tpu_custom_call.1} parent=1 // pred_check_branch
      %41 = sbr.rel (0) target = $region17
    $region16: #{tpu_custom_call.1} parent=1 // pred_region
      _
    $region17: #{tpu_custom_call.1} parent=1 // pred_fallthru
      _
    // Predicated region
    $region18: #{tpu_custom_call.1} parent=1 // pred_check
      _
    $region19: #{tpu_custom_call.1} parent=1 // pred_check_branch
      %43 = sbr.rel (0) target = $region21
    $region20: #{tpu_custom_call.1} parent=1 // pred_region
      _
    $region21: #{tpu_custom_call.1} parent=1 // pred_fallthru
      _
    // Predicated region
    $region22: #{tpu_custom_call.1} parent=1 // pred_check
      _
    $region23: #{tpu_custom_call.1} parent=1 // pred_check_branch
      %45 = sbr.rel (0) target = $region25
    $region24: #{tpu_custom_call.1} parent=1 // pred_region
      %46 = dma.done [#allocation4], 256
    $region25: #{tpu_custom_call.1} parent=1 // pred_fallthru
      _
    // Predicated region
    $region26: #{tpu_custom_call.1} parent=1 // pred_check
      _
    $region27: #{tpu_custom_call.1} parent=1 // pred_check_branch
      %48 = sbr.rel (0) target = $region29
    $region28: #{tpu_custom_call.1} parent=1 // pred_region
      %49 = dma.done [#allocation7], 2048
    $region29: #{tpu_custom_call.1} parent=1 // pred_fallthru
      _
    %v50 = vld [vmem:[#allocation3] sm:$0xff]
    %v51 = vld [vmem:[#allocation3 + $0x8] sm:$0xff]
    %v52 = vld [vmem:[#allocation6] sm:$0xff]
    %v53 = vld [vmem:[#allocation6 + $0x8] sm:$0xff]
    %v54 = vld [vmem:[#allocation6 + $0x10] sm:$0xff]
    %v55 = vld [vmem:[#allocation6 + $0x18] sm:$0xff]
    %v56 = vld [vmem:[#allocation6 + $0x20] sm:$0xff]
    %v57 = vld [vmem:[#allocation6 + $0x28] sm:$0xff]
    %v58 = vld [vmem:[#allocation6 + $0x30] sm:$0xff]
    %v59 = vld [vmem:[#allocation6 + $0x38] sm:$0xff]
    %v60 = vld [vmem:[#allocation6 + $0x40] sm:$0xff]
    %v61 = vld [vmem:[#allocation6 + $0x48] sm:$0xff]
    %v62 = vld [vmem:[#allocation6 + $0x50] sm:$0xff]
    %v63 = vld [vmem:[#allocation6 + $0x58] sm:$0xff]
    %v64 = vld [vmem:[#allocation6 + $0x60] sm:$0xff]
    %v65 = vld [vmem:[#allocation6 + $0x68] sm:$0xff]
    %v66 = vld [vmem:[#allocation6 + $0x70] sm:$0xff]
    %v67 = vld [vmem:[#allocation6 + $0x78] sm:$0xff]
    %v68 = vld [vmem:[%s3] sm:$0x3]
    %v70 = vlaneseq
    %v71 = vshrl.u32 %v70, 7
    %v72 = vsub.s32 0, %v71
    %v73 = vrot.slane %v68, %v72
    %v74 = vlaneseq
    %v75 = vshrl.u32 %v74, 7
    %v76 = vsub.s32 1, %v75
    %v77 = vrot.slane %v68, %v76
    %vm80 = vcmask 523264
    %v82 = vsel %vm80, %v50, 0
    %v85 = vsel %vm80, %v51, 0
    %87 = vmatprep.subr.mxu0 %v53
    %88 = vmatpush1.msra.mxu0 %v52
    %89 = vmatprep.subr.mxu0 %v55
    %90 = vmatpush1.msra.mxu0 %v54
    %91 = vmatprep.subr.mxu0 %v57
    %92 = vmatpush1.msra.mxu0 %v56
    %93 = vmatprep.subr.mxu0 %v59
    %94 = vmatpush1.msra.mxu0 %v58
    %95 = vmatprep.subr.mxu0 %v61
    %96 = vmatpush1.msra.mxu0 %v60
    %97 = vmatprep.subr.mxu0 %v63
    %98 = vmatpush1.msra.mxu0 %v62
    %99 = vmatprep.subr.mxu0 %v65
    %100 = vmatpush1.msra.mxu0 %v64
    %101 = vmatprep.subr.mxu0 %v67
    %102 = vmatpush1.msra.mxu0 %v66
    %103 = vmatprep.subr.mxu0 0.0
    %104 = vmatpush1.msra.mxu0 0.0
    %105 = vmatprep.subr.mxu0 0.0
    %106 = vmatpush1.msra.mxu0 0.0
    %107 = vmatprep.subr.mxu0 0.0
    %108 = vmatpush1.msra.mxu0 0.0
    %109 = vmatprep.subr.mxu0 0.0
    %110 = vmatpush1.msra.mxu0 0.0
    %111 = vmatprep.subr.mxu0 0.0
    %112 = vmatpush1.msra.mxu0 0.0
    %113 = vmatprep.subr.mxu0 0.0
    %114 = vmatpush1.msra.mxu0 0.0
    %115 = vmatprep.subr.mxu0 0.0
    %116 = vmatpush1.msra.mxu0 0.0
    %117 = vmatprep.subr.mxu0 0.0
    %118 = vmatpush1.msra.mxu0 0.0
    %119 = vmatprep.subr.mxu0 0.0
    %120 = vmatpush1.msra.mxu0 0.0
    %121 = vmatprep.subr.mxu0 0.0
    %122 = vmatpush1.msra.mxu0 0.0
    %123 = vmatprep.subr.mxu0 0.0
    %124 = vmatpush1.msra.mxu0 0.0
    %125 = vmatprep.subr.mxu0 0.0
    %126 = vmatpush1.msra.mxu0 0.0
    %127 = vmatprep.subr.mxu0 0.0
    %128 = vmatpush1.msra.mxu0 0.0
    %129 = vmatprep.subr.mxu0 0.0
    %130 = vmatpush1.msra.mxu0 0.0
    %131 = vmatprep.subr.mxu0 0.0
    %132 = vmatpush1.msra.mxu0 0.0
    %133 = vmatprep.subr.mxu0 0.0
    %134 = vmatpush1.msra.mxu0 0.0
    %135 = vmatprep.subr.mxu0 0.0
    %136 = vmatpush1.msra.mxu0 0.0
    %137 = vmatprep.subr.mxu0 0.0
    %138 = vmatpush1.msra.mxu0 0.0
    %139 = vmatprep.subr.mxu0 0.0
    %140 = vmatpush1.msra.mxu0 0.0
    %141 = vmatprep.subr.mxu0 0.0
    %142 = vmatpush1.msra.mxu0 0.0
    %143 = vmatprep.subr.mxu0 0.0
    %144 = vmatpush1.msra.mxu0 0.0
    %145 = vmatprep.subr.mxu0 0.0
    %146 = vmatpush1.msra.mxu0 0.0
    %147 = vmatprep.subr.mxu0 0.0
    %148 = vmatpush1.msra.mxu0 0.0
    %149 = vmatprep.subr.mxu0 0.0
    %150 = vmatpush1.msra.mxu0 0.0
    %151 = vmatprep.mubr.f32.mxu0 0.0
    %152 = vmatmul.mubr.f32.gmra.mrb[0].mxu0 %v82
    %v153 = vpop.f32.mrb[0].mxu0
    %v154 = vadd.f32 %v73, %v153
    %v155 = vpop.f32.mrb[0].mxu0
    %v156 = vadd.f32 %v77, %v155
    %157 = vmatprep.mubr.f32.mxu0 0.0
    %158 = vmatmul.mubr.f32.gmra.mrb[0].mxu0 %v85
    %v159 = vpop.f32.mrb[0].mxu0
    %v160 = vadd.f32 %v73, %v159
    %v161 = vpop.f32.mrb[0].mxu0
    %v162 = vadd.f32 %v77, %v161
    %163 = vdwg.mxu0
    %v164 = vmax.f32 %v154, 0.0
    %v165 = vmax.f32 %v156, 0.0
    %v166 = vmax.f32 %v160, 0.0
    %v167 = vmax.f32 %v162, 0.0
    %v168 = vld [vmem:[%s4] sm:$0x3]
    %v170 = vlaneseq
    %v171 = vshrl.u32 %v170, 7
    %v172 = vsub.s32 0, %v171
    %v173 = vrot.slane %v168, %v172
    %v174 = vlaneseq
    %v175 = vshrl.u32 %v174, 7
    %v176 = vsub.s32 1, %v175
    %v177 = vrot.slane %v168, %v176
    %v180 = vmul.f32 %v164, %v173
    %v181 = vmul.f32 %v165, %v177
    %v182 = vmul.f32 %v166, %v173
    %v183 = vmul.f32 %v167, %v177
    %v184 = vadd.f32 %v180, %v181
    %185 = vadd.xlane.f32.xlu0 %v184
    %v186 = vpop.xlane.xlu0 %185
    %v187 = vadd.f32 %v182, %v183
    %188 = vadd.xlane.f32.xlu0 %v187
    %v189 = vpop.xlane.xlu0 %188
    %s190 = sld [smem:[#allocation2]]
    %v191 = vstv %s190
    %v192 = vadd.f32 %v186, %v191
    %v193 = vadd.f32 %v189, %v191
    %v194 = vsub.f32 0.0, %v192
    %v195 = vsub.f32 0.0, %v193
    %v196 = vmul.f32 %v194, 1.442695
    %v197 = vpow.pop %v196
    %v198 = vmul.f32 %v195, 1.442695
    %v199 = vpow.pop %v198
    %v200 = vadd.f32 %v197, 1.0
    %v201 = vadd.f32 %v199, 1.0
    %v202 = vrcp.pop %v200
    %v203 = vrcp.pop %v201
    %v204 = vmul.f32 %v50, %v202
    %v205 = vmul.f32 %v51, %v203
    %206 = vst.msk [vmem:[#allocation8] sm:$0xff] %vm80, %v204
    %207 = vst.msk [vmem:[#allocation8 + $0x8] sm:$0xff] %vm80, %v205
    // Predicated region
    $region30: #{tpu_custom_call.1} parent=1 // pred_check
      _
    $region31: #{tpu_custom_call.1} parent=1 // pred_check_branch
      %209 = sbr.rel (0) target = $region33
    $region32: #{tpu_custom_call.1} parent=1 // pred_region
      %s211 = ssub.s32 256, 256
      %212 = vsyncadd [#allocation5], %s211
      %s213 = sshll.u32 [#allocation8], 4
      %s214 = int_to_ptr.vmem [resolvable:$true] %s213
      %219 = dma.vmem_to_hbm [thread:$0]  %s214, 256, %s5, [#allocation5], 128, 128, 8
    $region33: #{tpu_custom_call.1} parent=1 // pred_fallthru
      _
    // Predicated region
    $region34: #{tpu_custom_call.1} parent=1 // pred_check
      _
    $region35: #{tpu_custom_call.1} parent=1 // pred_check_branch
      %221 = sbr.rel (0) target = $region37
    $region36: #{tpu_custom_call.1} parent=1 // pred_region
      %222 = dma.done [#allocation5], 256
    $region37: #{tpu_custom_call.1} parent=1 // pred_fallthru
      _
    %223 = vsyncpa [#allocation4], 1
    %224 = vsyncpa [#allocation7], 1
    %225 = vsyncpa [#allocation5], 1

</llo_original>
